<compile_context>
chip_gen: v5e
topology: v5e:2x2
jax: 0.10.0
libtpu: 0.0.40
codegen_flags: <defaults>
</compile_context>

<pallas_src>
import jax
import jax.numpy as jnp
from jax import lax
from jax.experimental import pallas as pl
from jax.experimental.pallas import tpu as pltpu

EDGE_DIM = 12          # 18 - 6, from EdgeDescriptor_plane
HID1, HID2 = 64, 128   # pointnet conv1 / conv2 widths
PACK = 48              # packed per-edge input width
EPS = 1e-12


def _edge_encoder_kernel(pk_ref, w1_ref, b1_ref, w2_ref, b2_ref, w3_ref, b3_ref,
                         out_ref):
    pk = pk_ref[...]                       # (TE, 48) f32
    ci = pk[:, 0:3]
    cj = pk[:, 3:6]
    size_i = pk[:, 6:9]
    size_j = pk[:, 9:12]
    px = pk[:, 12:24]                      # 6 i-points then 6 j-points (x coords)
    py = pk[:, 24:36]
    pz = pk[:, 36:48]

    center = (ci + cj) * 0.5
    cx, cy, cz = center[:, 0:1], center[:, 1:2], center[:, 2:3]

    diff = cj - ci
    inv_n = lax.rsqrt(jnp.sum(diff * diff, axis=1, keepdims=True))
    v = diff * inv_n
    vx, vy = v[:, 0:1], v[:, 1:2]

    # normal_up    = (0, 0, 1)
    # normal_right = cross(v, up)      = ( vy, -vx, 0)
    # normal_front = cross(up, right)  = ( vx,  vy, 0)
    dxp = px - cx                          # (TE, 12)
    dyp = py - cy
    dzp = pz - cz

    d_up = dzp                             # plane dist to the "up" plane
    d_right = dxp * vy - dyp * vx
    d_front = dxp * vx + dyp * vy

    def mins_maxs(d):
        di, dj = d[:, 0:6], d[:, 6:12]
        return (jnp.min(di, axis=1, keepdims=True),
                jnp.max(di, axis=1, keepdims=True),
                jnp.min(dj, axis=1, keepdims=True),
                jnp.max(dj, axis=1, keepdims=True))

    fi_min, fi_max, fj_min, fj_max = mins_maxs(d_front)
    ri_min, ri_max, rj_min, rj_max = mins_maxs(d_right)
    ui_min, ui_max, uj_min, uj_max = mins_maxs(d_up)

    d_i = jnp.concatenate([fi_min, fi_max, ri_min, ri_max, ui_min, ui_max], axis=1)
    d_j = jnp.concatenate([fj_min, fj_max, rj_min, rj_max, uj_min, uj_max], axis=1)

    # --- edge descriptor (TE, 12), assembled in registers ---
    feat = jnp.concatenate([
        ci - cj,                                           # (TE, 3)
        jnp.log(size_i / size_j),                          # (TE, 3)
        jnp.log(jnp.abs(d_i) / (jnp.abs(d_j) + EPS)),      # (TE, 6) — one log
    ], axis=1)

    # --- pointnet encoder (Conv1d k=1 chain on length-1 sequence == MLP), no BN ---
    h = jnp.dot(feat.astype(jnp.bfloat16), w1_ref[...],
                preferred_element_type=jnp.float32) + b1_ref[...]
    h = jnp.maximum(h, 0.0)
    h = jnp.dot(h.astype(jnp.bfloat16), w2_ref[...],
                preferred_element_type=jnp.float32) + b2_ref[...]
    h = jnp.maximum(h, 0.0)
    h = jnp.dot(h.astype(jnp.bfloat16), w3_ref[...],
                preferred_element_type=jnp.float32) + b3_ref[...]
    # torch.max over the length-1 point dimension is the identity here.
    out_ref[...] = h.astype(out_ref.dtype)


def edge_encoder_forward(descriptors, edges, params, tile_e=None):
    """descriptors: (N, 26) f32, edges: (2, E) int32. Returns (E, out_dim) f32."""
    w1, b1, w2, b2, w3, b3 = params
    out_dim = w3.shape[1]
    out_pad = pl.cdiv(out_dim, 128) * 128

    E = edges.shape[1]
    if tile_e is None:
        # Big tiles, but keep >=2 grid steps when E allows (megacore on v7x).
        tile_e = max(8, min(512, pl.cdiv(pl.cdiv(E, 2), 8) * 8))
    e_pad = pl.cdiv(E, tile_e) * tile_e

    # MessagePassing(flow='target_to_source'): x_i = x[edge_index[0]], x_j = x[edge_index[1]]
    x_i = descriptors[edges[0]]
    x_j = descriptors[edges[1]]
    pts_i = x_i[:, 8:26].reshape(E, 6, 3)
    pts_j = x_j[:, 8:26].reshape(E, 6, 3)

    # Single lane-packed slab (layout plumbing in the wrapper).
    packed = jnp.concatenate([
        x_i[:, 0:3], x_j[:, 0:3],          # ci, cj
        x_i[:, 3:6], x_j[:, 3:6],          # sizes
        pts_i[..., 0], pts_j[..., 0],      # px (i then j)
        pts_i[..., 1], pts_j[..., 1],      # py
        pts_i[..., 2], pts_j[..., 2],      # pz
    ], axis=1).astype(jnp.float32)          # (E, 48)
    packed = jnp.pad(packed, ((0, e_pad - E), (0, 0)))

    # bf16 weights for the MXU (f32 accumulation in-kernel); f32 biases.
    w1b = w1.astype(jnp.bfloat16)
    w2b = w2.astype(jnp.bfloat16)
    w3b = jnp.pad(w3, ((0, 0), (0, out_pad - out_dim))).astype(jnp.bfloat16)
    b3p = jnp.pad(b3, ((0, 0), (0, out_pad - out_dim))).astype(jnp.float32)
    b1f = b1.astype(jnp.float32)
    b2f = b2.astype(jnp.float32)

    def espec(c):
        return pl.BlockSpec((tile_e, c), lambda e: (e, 0))

    def wspec(r, c):
        return pl.BlockSpec((r, c), lambda e: (0, 0))

    out = pl.pallas_call(
        _edge_encoder_kernel,
        out_shape=jax.ShapeDtypeStruct((e_pad, out_pad), jnp.float32),
        grid=(e_pad // tile_e,),
        in_specs=[
            espec(PACK),
            wspec(EDGE_DIM, HID1), wspec(1, HID1),
            wspec(HID1, HID2), wspec(1, HID2),
            wspec(HID2, out_pad), wspec(1, out_pad),
        ],
        out_specs=espec(out_pad),
        compiler_params=pltpu.CompilerParams(dimension_semantics=("parallel",)),
    )(packed, w1b, b1f, w2b, b2f, w3b, b3p)

    return out[:E, :out_dim]


def init_params(key, out_dim):
    ks = jax.random.split(key, 6)

    def lin_w(k, fan_in, fan_out):
        return (jax.random.normal(k, (fan_in, fan_out), jnp.float32)
                / jnp.sqrt(jnp.float32(fan_in)))

    w1 = lin_w(ks[0], EDGE_DIM, HID1)
    b1 = 0.01 * jax.random.normal(ks[1], (1, HID1), jnp.float32)
    w2 = lin_w(ks[2], HID1, HID2)
    b2 = 0.01 * jax.random.normal(ks[3], (1, HID2), jnp.float32)
    w3 = lin_w(ks[4], HID2, out_dim)
    b3 = 0.01 * jax.random.normal(ks[5], (1, out_dim), jnp.float32)
    return (w1, b1, w2, b2, w3, b3)


def reference_forward(descriptors, edges, params):
    """Pure-JAX reference mirroring the PyTorch forward (f32 throughout)."""
    x_i = descriptors[edges[0]]
    x_j = descriptors[edges[1]]
    ci, cj = x_i[:, :3], x_j[:, :3]
    center = (ci + cj) * 0.5
    v = (cj - ci) / jnp.linalg.norm(cj - ci, axis=1, keepdims=True)
    up = jnp.tile(jnp.array([0.0, 0.0, 1.0], jnp.float32), (x_i.shape[0], 1))
    right = jnp.cross(v, up)
    front = jnp.cross(up, right)
    pts_i = x_i[:, 8:].reshape(-1, 6, 3)
    pts_j = x_j[:, 8:].reshape(-1, 6, 3)
    c = center[:, None, :]

    def dist(p, n):
        return jnp.einsum('bpk,bk->bp', p - c, n)

    d_z_i, d_z_j = dist(pts_i, up), dist(pts_j, up)
    d_y_i, d_y_j = dist(pts_i, right), dist(pts_j, right)
    d_x_i, d_x_j = dist(pts_i, front), dist(pts_j, front)

    def mm(dx, dy, dz):
        return jnp.stack([dx.min(1), dx.max(1), dy.min(1), dy.max(1),
                          dz.min(1), dz.max(1)], axis=1)

    d_i, d_j = mm(d_x_i, d_y_i, d_z_i), mm(d_x_j, d_y_j, d_z_j)
    feat = jnp.concatenate([ci - cj,
                            jnp.log(x_i[:, 3:6] / x_j[:, 3:6]),
                            jnp.log(jnp.abs(d_i) / (jnp.abs(d_j) + EPS))], axis=1)
    w1, b1, w2, b2, w3, b3 = params
    h = jnp.maximum(feat @ w1 + b1, 0.0)
    h = jnp.maximum(h @ w2 + b2, 0.0)
    return h @ w3 + b3


if __name__ == "__main__":
    key = jax.random.PRNGKey(0)
    k_desc, k_size, k_params = jax.random.split(key, 3)

    n_node, n_edge, out_dim = 4, 8, 32
    descriptors = jax.random.normal(k_desc, (n_node, 26), jnp.float32)
    # columns 3:6 are object sizes; keep them positive so log(size_i/size_j) is defined
    descriptors = descriptors.at[:, 3:6].set(
        jax.random.uniform(k_size, (n_node, 3), jnp.float32, minval=0.5, maxval=1.5))

    src = jnp.array([0, 1, 2, 3, 0, 1, 2, 3], dtype=jnp.int32)
    dst = jnp.array([1, 2, 3, 0, 2, 3, 0, 1], dtype=jnp.int32)
    edges = jnp.stack([src, dst])           # (2, E)

    params = init_params(k_params, out_dim)

    out = edge_encoder_forward(descriptors, edges, params)
    out = jax.block_until_ready(out)

    ref = reference_forward(descriptors, edges, params)
    assert out.shape == (n_edge, out_dim), out.shape
    assert jnp.allclose(out, ref, rtol=2e-2, atol=2e-2), "mismatch vs JAX reference"

    print("KERNEL_OK")
</pallas_src>

<mosaic_0001>
module attributes {stable_mosaic.version = 11 : i64} {
  func.func @_edge_encoder_kernel(%arg0: i32, %arg1: memref<8x48xf32, #tpu.memory_space<vmem>>, %arg2: memref<12x64xbf16, #tpu.memory_space<vmem>>, %arg3: memref<1x64xf32, #tpu.memory_space<vmem>>, %arg4: memref<64x128xbf16, #tpu.memory_space<vmem>>, %arg5: memref<1x128xf32, #tpu.memory_space<vmem>>, %arg6: memref<128x128xbf16, #tpu.memory_space<vmem>>, %arg7: memref<1x128xf32, #tpu.memory_space<vmem>>, %arg8: memref<8x128xf32, #tpu.memory_space<vmem>>) attributes {dimension_semantics = [#tpu.dimension_semantics<parallel>], iteration_bounds = array<i64: 1>, scalar_prefetch = 0 : i64, scratch_operands = 0 : i64, tpu.core_type = #tpu.core_type<tc>, window_params = [{transform_indices = @transform_0, window_bounds = array<i64: 8, 48>}, {pipeline_mode = #tpu.pipeline_mode<synchronous>, transform_indices = @transform_1, window_bounds = array<i64: 12, 64>}, {pipeline_mode = #tpu.pipeline_mode<synchronous>, transform_indices = @transform_2, window_bounds = array<i64: 1, 64>}, {pipeline_mode = #tpu.pipeline_mode<synchronous>, transform_indices = @transform_3, window_bounds = array<i64: 64, 128>}, {pipeline_mode = #tpu.pipeline_mode<synchronous>, transform_indices = @transform_4, window_bounds = array<i64: 1, 128>}, {pipeline_mode = #tpu.pipeline_mode<synchronous>, transform_indices = @transform_5, window_bounds = array<i64: 128, 128>}, {pipeline_mode = #tpu.pipeline_mode<synchronous>, transform_indices = @transform_6, window_bounds = array<i64: 1, 128>}, {transform_indices = @transform_7, window_bounds = array<i64: 8, 128>}]} {
    %c0 = arith.constant 0 : index
    %c0_0 = arith.constant 0 : index
    %0 = vector.load %arg1[%c0, %c0_0] : memref<8x48xf32, #tpu.memory_space<vmem>>, vector<8x48xf32>
    %1 = vector.extract_strided_slice %0 {offsets = [0, 0], sizes = [8, 3], strides = [1, 1]} : vector<8x48xf32> to vector<8x3xf32>
    %2 = vector.extract_strided_slice %0 {offsets = [0, 3], sizes = [8, 3], strides = [1, 1]} : vector<8x48xf32> to vector<8x3xf32>
    %3 = vector.extract_strided_slice %0 {offsets = [0, 6], sizes = [8, 3], strides = [1, 1]} : vector<8x48xf32> to vector<8x3xf32>
    %4 = vector.extract_strided_slice %0 {offsets = [0, 9], sizes = [8, 3], strides = [1, 1]} : vector<8x48xf32> to vector<8x3xf32>
    %5 = vector.extract_strided_slice %0 {offsets = [0, 12], sizes = [8, 12], strides = [1, 1]} : vector<8x48xf32> to vector<8x12xf32>
    %6 = vector.extract_strided_slice %0 {offsets = [0, 24], sizes = [8, 12], strides = [1, 1]} : vector<8x48xf32> to vector<8x12xf32>
    %7 = vector.extract_strided_slice %0 {offsets = [0, 36], sizes = [8, 12], strides = [1, 1]} : vector<8x48xf32> to vector<8x12xf32>
    %8 = arith.addf %1, %2 : vector<8x3xf32>
    %cst = arith.constant 5.000000e-01 : f32
    %9 = vector.broadcast %cst : f32 to vector<8x3xf32>
    %10 = arith.mulf %8, %9 : vector<8x3xf32>
    %11 = vector.extract_strided_slice %10 {offsets = [0, 0], sizes = [8, 1], strides = [1, 1]} : vector<8x3xf32> to vector<8x1xf32>
    %12 = vector.extract_strided_slice %10 {offsets = [0, 1], sizes = [8, 1], strides = [1, 1]} : vector<8x3xf32> to vector<8x1xf32>
    %13 = vector.extract_strided_slice %10 {offsets = [0, 2], sizes = [8, 1], strides = [1, 1]} : vector<8x3xf32> to vector<8x1xf32>
    %14 = arith.subf %2, %1 : vector<8x3xf32>
    %15 = arith.mulf %14, %14 : vector<8x3xf32>
    %cst_1 = arith.constant dense<0.000000e+00> : vector<8xf32>
    %16 = vector.multi_reduction <add>, %15, %cst_1 [1] : vector<8x3xf32> to vector<8xf32>
    %17 = vector.shape_cast %16 : vector<8xf32> to vector<8x1xf32>
    %18 = math.rsqrt %17 : vector<8x1xf32>
    %19 = vector.broadcast %18 : vector<8x1xf32> to vector<8x3xf32>
    %20 = arith.mulf %14, %19 : vector<8x3xf32>
    %21 = vector.extract_strided_slice %20 {offsets = [0, 0], sizes = [8, 1], strides = [1, 1]} : vector<8x3xf32> to vector<8x1xf32>
    %22 = vector.extract_strided_slice %20 {offsets = [0, 1], sizes = [8, 1], strides = [1, 1]} : vector<8x3xf32> to vector<8x1xf32>
    %23 = vector.broadcast %11 : vector<8x1xf32> to vector<8x12xf32>
    %24 = arith.subf %5, %23 : vector<8x12xf32>
    %25 = vector.broadcast %12 : vector<8x1xf32> to vector<8x12xf32>
    %26 = arith.subf %6, %25 : vector<8x12xf32>
    %27 = vector.broadcast %13 : vector<8x1xf32> to vector<8x12xf32>
    %28 = arith.subf %7, %27 : vector<8x12xf32>
    %29 = vector.broadcast %22 : vector<8x1xf32> to vector<8x12xf32>
    %30 = arith.mulf %24, %29 : vector<8x12xf32>
    %31 = vector.broadcast %21 : vector<8x1xf32> to vector<8x12xf32>
    %32 = arith.mulf %26, %31 : vector<8x12xf32>
    %33 = arith.subf %30, %32 : vector<8x12xf32>
    %34 = vector.broadcast %21 : vector<8x1xf32> to vector<8x12xf32>
    %35 = arith.mulf %24, %34 : vector<8x12xf32>
    %36 = vector.broadcast %22 : vector<8x1xf32> to vector<8x12xf32>
    %37 = arith.mulf %26, %36 : vector<8x12xf32>
    %38 = arith.addf %35, %37 : vector<8x12xf32>
    %39 = vector.extract_strided_slice %38 {offsets = [0, 0], sizes = [8, 6], strides = [1, 1]} : vector<8x12xf32> to vector<8x6xf32>
    %40 = vector.extract_strided_slice %38 {offsets = [0, 6], sizes = [8, 6], strides = [1, 1]} : vector<8x12xf32> to vector<8x6xf32>
    %cst_2 = arith.constant dense<0x7F800000> : vector<8xf32>
    %41 = vector.multi_reduction <minimumf>, %39, %cst_2 [1] : vector<8x6xf32> to vector<8xf32>
    %42 = vector.shape_cast %41 : vector<8xf32> to vector<8x1xf32>
    %cst_3 = arith.constant dense<0xFF800000> : vector<8xf32>
    %43 = vector.multi_reduction <maximumf>, %39, %cst_3 [1] : vector<8x6xf32> to vector<8xf32>
    %44 = vector.shape_cast %43 : vector<8xf32> to vector<8x1xf32>
    %cst_4 = arith.constant dense<0x7F800000> : vector<8xf32>
    %45 = vector.multi_reduction <minimumf>, %40, %cst_4 [1] : vector<8x6xf32> to vector<8xf32>
    %46 = vector.shape_cast %45 : vector<8xf32> to vector<8x1xf32>
    %cst_5 = arith.constant dense<0xFF800000> : vector<8xf32>
    %47 = vector.multi_reduction <maximumf>, %40, %cst_5 [1] : vector<8x6xf32> to vector<8xf32>
    %48 = vector.shape_cast %47 : vector<8xf32> to vector<8x1xf32>
    %49 = vector.extract_strided_slice %33 {offsets = [0, 0], sizes = [8, 6], strides = [1, 1]} : vector<8x12xf32> to vector<8x6xf32>
    %50 = vector.extract_strided_slice %33 {offsets = [0, 6], sizes = [8, 6], strides = [1, 1]} : vector<8x12xf32> to vector<8x6xf32>
    %cst_6 = arith.constant dense<0x7F800000> : vector<8xf32>
    %51 = vector.multi_reduction <minimumf>, %49, %cst_6 [1] : vector<8x6xf32> to vector<8xf32>
    %52 = vector.shape_cast %51 : vector<8xf32> to vector<8x1xf32>
    %cst_7 = arith.constant dense<0xFF800000> : vector<8xf32>
    %53 = vector.multi_reduction <maximumf>, %49, %cst_7 [1] : vector<8x6xf32> to vector<8xf32>
    %54 = vector.shape_cast %53 : vector<8xf32> to vector<8x1xf32>
    %cst_8 = arith.constant dense<0x7F800000> : vector<8xf32>
    %55 = vector.multi_reduction <minimumf>, %50, %cst_8 [1] : vector<8x6xf32> to vector<8xf32>
    %56 = vector.shape_cast %55 : vector<8xf32> to vector<8x1xf32>
    %cst_9 = arith.constant dense<0xFF800000> : vector<8xf32>
    %57 = vector.multi_reduction <maximumf>, %50, %cst_9 [1] : vector<8x6xf32> to vector<8xf32>
    %58 = vector.shape_cast %57 : vector<8xf32> to vector<8x1xf32>
    %59 = vector.extract_strided_slice %28 {offsets = [0, 0], sizes = [8, 6], strides = [1, 1]} : vector<8x12xf32> to vector<8x6xf32>
    %60 = vector.extract_strided_slice %28 {offsets = [0, 6], sizes = [8, 6], strides = [1, 1]} : vector<8x12xf32> to vector<8x6xf32>
    %cst_10 = arith.constant dense<0x7F800000> : vector<8xf32>
    %61 = vector.multi_reduction <minimumf>, %59, %cst_10 [1] : vector<8x6xf32> to vector<8xf32>
    %62 = vector.shape_cast %61 : vector<8xf32> to vector<8x1xf32>
    %cst_11 = arith.constant dense<0xFF800000> : vector<8xf32>
    %63 = vector.multi_reduction <maximumf>, %59, %cst_11 [1] : vector<8x6xf32> to vector<8xf32>
    %64 = vector.shape_cast %63 : vector<8xf32> to vector<8x1xf32>
    %cst_12 = arith.constant dense<0x7F800000> : vector<8xf32>
    %65 = vector.multi_reduction <minimumf>, %60, %cst_12 [1] : vector<8x6xf32> to vector<8xf32>
    %66 = vector.shape_cast %65 : vector<8xf32> to vector<8x1xf32>
    %cst_13 = arith.constant dense<0xFF800000> : vector<8xf32>
    %67 = vector.multi_reduction <maximumf>, %60, %cst_13 [1] : vector<8x6xf32> to vector<8xf32>
    %68 = vector.shape_cast %67 : vector<8xf32> to vector<8x1xf32>
    %69 = tpu.concatenate %42, %44, %52, %54, %62, %64 in 1 : vector<8x1xf32>, vector<8x1xf32>, vector<8x1xf32>, vector<8x1xf32>, vector<8x1xf32>, vector<8x1xf32> -> vector<8x6xf32>
    %70 = tpu.concatenate %46, %48, %56, %58, %66, %68 in 1 : vector<8x1xf32>, vector<8x1xf32>, vector<8x1xf32>, vector<8x1xf32>, vector<8x1xf32>, vector<8x1xf32> -> vector<8x6xf32>
    %71 = arith.subf %1, %2 : vector<8x3xf32>
    %72 = arith.divf %3, %4 : vector<8x3xf32>
    %73 = math.log %72 : vector<8x3xf32>
    %74 = math.absf %69 : vector<8x6xf32>
    %75 = math.absf %70 : vector<8x6xf32>
    %cst_14 = arith.constant 9.99999996E-13 : f32
    %76 = vector.broadcast %cst_14 : f32 to vector<8x6xf32>
    %77 = arith.addf %75, %76 : vector<8x6xf32>
    %78 = arith.divf %74, %77 : vector<8x6xf32>
    %79 = math.log %78 : vector<8x6xf32>
    %80 = tpu.concatenate %71, %73, %79 in 1 : vector<8x3xf32>, vector<8x3xf32>, vector<8x6xf32> -> vector<8x12xf32>
    %81 = arith.truncf %80 : vector<8x12xf32> to vector<8x12xbf16>
    %c0_15 = arith.constant 0 : index
    %c0_16 = arith.constant 0 : index
    %82 = vector.load %arg2[%c0_15, %c0_16] : memref<12x64xbf16, #tpu.memory_space<vmem>>, vector<12x64xbf16>
    %cst_17 = arith.constant dense<0.000000e+00> : vector<8x64xf32>
    %83 = tpu.matmul %81, %82, %cst_17 {dimension_numbers = #tpu.dot_dimension_numbers<[1], [0], [0], [1], [0, 0, 1, 1], [], []>} : vector<8x12xbf16>, vector<12x64xbf16>, vector<8x64xf32> -> vector<8x64xf32>
    %c0_18 = arith.constant 0 : index
    %c0_19 = arith.constant 0 : index
    %84 = vector.load %arg3[%c0_18, %c0_19] : memref<1x64xf32, #tpu.memory_space<vmem>>, vector<1x64xf32>
    %85 = vector.broadcast %84 : vector<1x64xf32> to vector<8x64xf32>
    %86 = arith.addf %83, %85 : vector<8x64xf32>
    %cst_20 = arith.constant 0.000000e+00 : f32
    %87 = vector.broadcast %cst_20 : f32 to vector<8x64xf32>
    %88 = arith.maximumf %86, %87 : vector<8x64xf32>
    %89 = arith.truncf %88 : vector<8x64xf32> to vector<8x64xbf16>
    %c0_21 = arith.constant 0 : index
    %c0_22 = arith.constant 0 : index
    %90 = vector.load %arg4[%c0_21, %c0_22] : memref<64x128xbf16, #tpu.memory_space<vmem>>, vector<64x128xbf16>
    %cst_23 = arith.constant dense<0.000000e+00> : vector<8x128xf32>
    %91 = tpu.matmul %89, %90, %cst_23 {dimension_numbers = #tpu.dot_dimension_numbers<[1], [0], [0], [1], [0, 0, 1, 1], [], []>} : vector<8x64xbf16>, vector<64x128xbf16>, vector<8x128xf32> -> vector<8x128xf32>
    %c0_24 = arith.constant 0 : index
    %c0_25 = arith.constant 0 : index
    %92 = vector.load %arg5[%c0_24, %c0_25] : memref<1x128xf32, #tpu.memory_space<vmem>>, vector<1x128xf32>
    %93 = vector.broadcast %92 : vector<1x128xf32> to vector<8x128xf32>
    %94 = arith.addf %91, %93 : vector<8x128xf32>
    %cst_26 = arith.constant 0.000000e+00 : f32
    %95 = vector.broadcast %cst_26 : f32 to vector<8x128xf32>
    %96 = arith.maximumf %94, %95 : vector<8x128xf32>
    %97 = arith.truncf %96 : vector<8x128xf32> to vector<8x128xbf16>
    %c0_27 = arith.constant 0 : index
    %c0_28 = arith.constant 0 : index
    %98 = vector.load %arg6[%c0_27, %c0_28] : memref<128x128xbf16, #tpu.memory_space<vmem>>, vector<128x128xbf16>
    %cst_29 = arith.constant dense<0.000000e+00> : vector<8x128xf32>
    %99 = tpu.matmul %97, %98, %cst_29 {dimension_numbers = #tpu.dot_dimension_numbers<[1], [0], [0], [1], [0, 0, 1, 1], [], []>} : vector<8x128xbf16>, vector<128x128xbf16>, vector<8x128xf32> -> vector<8x128xf32>
    %c0_30 = arith.constant 0 : index
    %c0_31 = arith.constant 0 : index
    %100 = vector.load %arg7[%c0_30, %c0_31] : memref<1x128xf32, #tpu.memory_space<vmem>>, vector<1x128xf32>
    %101 = vector.broadcast %100 : vector<1x128xf32> to vector<8x128xf32>
    %102 = arith.addf %99, %101 : vector<8x128xf32>
    %c0_32 = arith.constant 0 : index
    %c0_33 = arith.constant 0 : index
    %103 = vector.load %arg8[%c0_32, %c0_33] : memref<8x128xf32, #tpu.memory_space<vmem>>, vector<8x128xf32>
    tpu.vector_store %arg8[%c0_32, %c0_33], %102 {strides = array<i32>} : memref<8x128xf32, #tpu.memory_space<vmem>>, vector<8x128xf32>,
    return
  }
  func.func @transform_0(%arg0: i32) -> (i32, i32) {
    %c0_i32 = arith.constant 0 : i32
    %c0_i32_0 = arith.constant 0 : i32
    return %arg0, %c0_i32 : i32, i32
  }
  func.func @transform_1(%arg0: i32) -> (i32, i32) {
    %c0_i32 = arith.constant 0 : i32
    %c0_i32_0 = arith.constant 0 : i32
    %c0_i32_1 = arith.constant 0 : i32
    return %c0_i32, %c0_i32_0 : i32, i32
  }
  func.func @transform_2(%arg0: i32) -> (i32, i32) {
    %c0_i32 = arith.constant 0 : i32
    %c0_i32_0 = arith.constant 0 : i32
    %c0_i32_1 = arith.constant 0 : i32
    return %c0_i32, %c0_i32_0 : i32, i32
  }
  func.func @transform_3(%arg0: i32) -> (i32, i32) {
    %c0_i32 = arith.constant 0 : i32
    %c0_i32_0 = arith.constant 0 : i32
    %c0_i32_1 = arith.constant 0 : i32
    return %c0_i32, %c0_i32_0 : i32, i32
  }
  func.func @transform_4(%arg0: i32) -> (i32, i32) {
    %c0_i32 = arith.constant 0 : i32
    %c0_i32_0 = arith.constant 0 : i32
    %c0_i32_1 = arith.constant 0 : i32
    return %c0_i32, %c0_i32_0 : i32, i32
  }
  func.func @transform_5(%arg0: i32) -> (i32, i32) {
    %c0_i32 = arith.constant 0 : i32
    %c0_i32_0 = arith.constant 0 : i32
    %c0_i32_1 = arith.constant 0 : i32
    return %c0_i32, %c0_i32_0 : i32, i32
  }
  func.func @transform_6(%arg0: i32) -> (i32, i32) {
    %c0_i32 = arith.constant 0 : i32
    %c0_i32_0 = arith.constant 0 : i32
    %c0_i32_1 = arith.constant 0 : i32
    return %c0_i32, %c0_i32_0 : i32, i32
  }
  func.func @transform_7(%arg0: i32) -> (i32, i32) {
    %c0_i32 = arith.constant 0 : i32
    %c0_i32_0 = arith.constant 0 : i32
    return %arg0, %c0_i32 : i32, i32
  }
}

</mosaic_0001>

<llo_original>
// kernel: tpu_custom_call.1
$region0: #{tpu_custom_call.1}
  #allocation0 [shape = 'u32[]', space=smem, size = 0x4, offset = 0x4, fixed_abs, tag = 'smem constant byte address 0x4 - core index']
  #allocation1 [shape = 'u32[72,128]{1,0:T(1,128)}', space=vmem, size = 0x9000, scoped, tag = 'internal scratch']
  %s0 = inlined_call_operand.hbm [shape: f32[8,48], index: 0, kind: input, shape index: {}]
  %s1 = inlined_call_operand.hbm [shape: bf16[12,64], index: 1, kind: input, shape index: {}]
  %s2 = inlined_call_operand.vmem [shape: f32[1,64], index: 2, kind: input, shape index: {}]
  %s3 = inlined_call_operand.hbm [shape: bf16[64,128], index: 3, kind: input, shape index: {}]
  %s4 = inlined_call_operand.vmem [shape: f32[1,128], index: 4, kind: input, shape index: {}]
  %s5 = inlined_call_operand.hbm [shape: bf16[128,128], index: 5, kind: input, shape index: {}]
  %s6 = inlined_call_operand.vmem [shape: f32[1,128], index: 6, kind: input, shape index: {}]
  %s7 = inlined_call_operand.hbm [shape: f32[8,128], index: 7, kind: output, shape index: {}]
  %s8 = sld [smem:[#allocation0]]
  $region54: #{tpu_custom_call.1} parent=0
    _
  %s10 = ssub.s32 1, %s8
  %s11 = scalar_select 0, %s10, %s8
  $region1: #{tpu_custom_call.1} parent=0
    #allocation2 [shape = 'u8[4096]{0}', space=vmem, size = 0x1000, scoped, tag = 'input window, operand 0, single buffered']
    #allocation3 [shape = 's32[1]{0}', space=sflag, size = 0x4, scoped, tag = 'scoped memory for tpu_custom_call.1']
    #allocation4 [shape = 's32[1]{0}', space=sflag, size = 0x4, scoped, tag = 'scoped memory for tpu_custom_call.1']
    #allocation5 [shape = 'u8[4096]{0}', space=vmem, size = 0x1000, scoped, tag = 'input window, operand 1, single buffered']
    #allocation6 [shape = 's32[1]{0}', space=sflag, size = 0x4, scoped, tag = 'scoped memory for tpu_custom_call.1']
    #allocation7 [shape = 'u8[16384]{0}', space=vmem, size = 0x4000, scoped, tag = 'input window, operand 3, single buffered']
    #allocation8 [shape = 'u8[32768]{0}', space=vmem, size = 0x8000, scoped, tag = 'input window, operand 5, single buffered']
    #allocation9 [shape = 's32[1]{0}', space=sflag, size = 0x4, scoped, tag = 'scoped memory for tpu_custom_call.1']
    #allocation10 [shape = 'u8[4096]{0}', space=vmem, size = 0x1000, scoped, tag = 'output window, operand 0, single buffered']
    %12 = vsyncpa [#allocation3], 0
    %13 = vsyncpa [#allocation6], 0
    %14 = vsyncpa [#allocation9], 0
    %15 = vsyncpa [#allocation4], 0
    // Predicated region
    $region2: #{tpu_custom_call.1} parent=1 // pred_check
      _
    $region3: #{tpu_custom_call.1} parent=1 // pred_check_branch
      %17 = sbr.rel (0) target = $region5
    $region4: #{tpu_custom_call.1} parent=1 // pred_region
      %19 = vsyncadd [#allocation3], 0
      %s21 = sshll.u32 %s0, 4
      %s22 = int_to_ptr.hbm [resolvable:$true] %s21
      %s23 = sshll.u32 [#allocation2], 4
      %s24 = int_to_ptr.vmem [resolvable:$true] %s23
      %26 = dma.hbm_to_vmem [thread:$0]  %s22, 128, %s24, [#allocation3]
    $region5: #{tpu_custom_call.1} parent=1 // pred_fallthru
      _
    // Predicated region
    $region6: #{tpu_custom_call.1} parent=1 // pred_check
      _
    $region7: #{tpu_custom_call.1} parent=1 // pred_check_branch
      %28 = sbr.rel (0) target = $region9
    $region8: #{tpu_custom_call.1} parent=1 // pred_region
      %30 = vsyncadd [#allocation6], 0
      %s31 = sshll.u32 %s1, 4
      %s32 = int_to_ptr.hbm [resolvable:$true] %s31
      %s33 = sshll.u32 [#allocation5], 4
      %s34 = int_to_ptr.vmem [resolvable:$true] %s33
      %39 = dma.hbm_to_vmem [thread:$0]  %s32, 128, %s34, [#allocation6], 64, 64, 4
    $region9: #{tpu_custom_call.1} parent=1 // pred_fallthru
      _
    // Predicated region
    $region10: #{tpu_custom_call.1} parent=1 // pred_check
      _
    $region11: #{tpu_custom_call.1} parent=1 // pred_check_branch
      %41 = sbr.rel (0) target = $region13
    $region12: #{tpu_custom_call.1} parent=1 // pred_region
      _
    $region13: #{tpu_custom_call.1} parent=1 // pred_fallthru
      _
    // Predicated region
    $region14: #{tpu_custom_call.1} parent=1 // pred_check
      _
    $region15: #{tpu_custom_call.1} parent=1 // pred_check_branch
      %43 = sbr.rel (0) target = $region17
    $region16: #{tpu_custom_call.1} parent=1 // pred_region
      %45 = vsyncadd [#allocation6], 0
      %s46 = sshll.u32 %s3, 4
      %s47 = int_to_ptr.hbm [resolvable:$true] %s46
      %s48 = sshll.u32 [#allocation7], 4
      %s49 = int_to_ptr.vmem [resolvable:$true] %s48
      %54 = dma.hbm_to_vmem [thread:$0]  %s47, 512, %s49, [#allocation6], 64, 64, 4
    $region17: #{tpu_custom_call.1} parent=1 // pred_fallthru
      _
    // Predicated region
    $region18: #{tpu_custom_call.1} parent=1 // pred_check
      _
    $region19: #{tpu_custom_call.1} parent=1 // pred_check_branch
      %56 = sbr.rel (0) target = $region21
    $region20: #{tpu_custom_call.1} parent=1 // pred_region
      _
    $region21: #{tpu_custom_call.1} parent=1 // pred_fallthru
      _
    // Predicated region
    $region22: #{tpu_custom_call.1} parent=1 // pred_check
      _
    $region23: #{tpu_custom_call.1} parent=1 // pred_check_branch
      %58 = sbr.rel (0) target = $region25
    $region24: #{tpu_custom_call.1} parent=1 // pred_region
      %60 = vsyncadd [#allocation9], 0
      %s61 = sshll.u32 %s5, 4
      %s62 = int_to_ptr.hbm [resolvable:$true] %s61
      %s63 = sshll.u32 [#allocation8], 4
      %s64 = int_to_ptr.vmem [resolvable:$true] %s63
      %69 = dma.hbm_to_vmem [thread:$0]  %s62, 1024, %s64, [#allocation9], 64, 64, 4
    $region25: #{tpu_custom_call.1} parent=1 // pred_fallthru
      _
    // Predicated region
    $region26: #{tpu_custom_call.1} parent=1 // pred_check
      _
    $region27: #{tpu_custom_call.1} parent=1 // pred_check_branch
      %71 = sbr.rel (0) target = $region29
    $region28: #{tpu_custom_call.1} parent=1 // pred_region
      _
    $region29: #{tpu_custom_call.1} parent=1 // pred_fallthru
      _
    // Predicated region
    $region30: #{tpu_custom_call.1} parent=1 // pred_check
      _
    $region31: #{tpu_custom_call.1} parent=1 // pred_check_branch
      %73 = sbr.rel (0) target = $region33
    $region32: #{tpu_custom_call.1} parent=1 // pred_region
      %75 = dma.done [#allocation3], 128
    $region33: #{tpu_custom_call.1} parent=1 // pred_fallthru
      _
    // Predicated region
    $region34: #{tpu_custom_call.1} parent=1 // pred_check
      _
    $region35: #{tpu_custom_call.1} parent=1 // pred_check_branch
      %77 = sbr.rel (0) target = $region37
    $region36: #{tpu_custom_call.1} parent=1 // pred_region
      %79 = dma.done [#allocation6], 128
    $region37: #{tpu_custom_call.1} parent=1 // pred_fallthru
      _
    // Predicated region
    $region38: #{tpu_custom_call.1} parent=1 // pred_check
      _
    $region39: #{tpu_custom_call.1} parent=1 // pred_check_branch
      %81 = sbr.rel (0) target = $region41
    $region40: #{tpu_custom_call.1} parent=1 // pred_region
      %83 = dma.done [#allocation6], 512
    $region41: #{tpu_custom_call.1} parent=1 // pred_fallthru
      _
    // Predicated region
    $region42: #{tpu_custom_call.1} parent=1 // pred_check
      _
    $region43: #{tpu_custom_call.1} parent=1 // pred_check_branch
      %85 = sbr.rel (0) target = $region45
    $region44: #{tpu_custom_call.1} parent=1 // pred_region
      %87 = dma.done [#allocation9], 1024
    $region45: #{tpu_custom_call.1} parent=1 // pred_fallthru
      _
    %v89 = vld [vmem:[#allocation2] sm:$0xff]
    %91 = vrot.lane.b32.xlu0 %v89, 125
    %v92 = vpop.permute.xlu0 %91
    %v94 = vadd.f32 %v89, %v92
    %v95 = vmul.f32 %v94, 0.5
    %96 = vrot.lane.b32.xlu0 %v89, 3
    %v97 = vpop.permute.xlu0 %96
    %v99 = vsub.f32 %v89, %v97
    %v100 = vmul.f32 %v99, %v99
    %102 = vrot.lane.b32.xlu0 %v100, 125
    %v103 = vpop.permute.xlu0 %102
    %vm105 = vcmask 23552
    %v106 = vsel %vm105, %v103, 0.0
    %107 = vadd.xlane.f32.xlu0 %v106
    %v108 = vpop.xlane.xlu0 %107
    %v109 = vrsqrt.pop %v108
    %v110 = vmul.f32 %v109, %v108
    %v111 = vmul.f32 %v110, %v109
    %v112 = vmul.f32 0.5, %v111
    %v113 = vsub.f32 1.5, %v112
    %v114 = vmul.f32 %v109, %v113
    %vm115 = vweird.f32 %v108
    %vm116 = vweird.f32 %v109
    %vm117 = vmor %vm115, %vm116
    %v118 = vsel %vm117, %v109, %v114
    %v119 = vmul.f32 %v99, %v118
    %121 = vset.pattern.permute.xlu0 0
    %122 = vperm.xlu0 %121, %v95
    %v123 = vpop.permute.xlu0 %122
    %v125 = vsub.f32 %v89, %v123
    %126 = vset.pattern.permute.xlu0 1
    %127 = vperm.xlu0 %126, %v95
    %v128 = vpop.permute.xlu0 %127
    %v130 = vsub.f32 %v89, %v128
    %131 = vset.pattern.permute.xlu0 2
    %132 = vperm.xlu0 %131, %v95
    %v133 = vpop.permute.xlu0 %132
    %v135 = vsub.f32 %v89, %v133
    %137 = vset.pattern.permute.xlu0 4
    %138 = vperm.xlu0 %137, %v119
    %v139 = vpop.permute.xlu0 %138
    %v141 = vmul.f32 %v125, %v139
    %142 = vset.pattern.permute.xlu0 3
    %143 = vperm.xlu0 %142, %v119
    %v144 = vpop.permute.xlu0 %143
    %v146 = vmul.f32 %v130, %v144
    %148 = vrot.lane.b32.xlu0 %v146, 116
    %v149 = vpop.permute.xlu0 %148
    %v151 = vsub.f32 %v141, %v149
    %v152 = vmul.f32 %v125, %v144
    %v153 = vmul.f32 %v130, %v139
    %155 = vrot.lane.b32.xlu0 %v153, 116
    %v156 = vpop.permute.xlu0 %155
    %v158 = vadd.f32 %v152, %v156
    %vm159 = vcmask 146528
    %v160 = vsel %vm159, %v158, inf
    %161 = vmin.xlane.f32.xlu0 %v160
    %v162 = vpop.xlane.xlu0 %161
    %v163 = vsel %vm159, %v158, -inf
    %164 = vmax.xlane.f32.xlu0 %v163
    %v165 = vpop.xlane.xlu0 %164
    %vm166 = vcmask 195728
    %v167 = vsel %vm166, %v158, inf
    %168 = vmin.xlane.f32.xlu0 %v167
    %v169 = vpop.xlane.xlu0 %168
    %v170 = vsel %vm166, %v158, -inf
    %171 = vmax.xlane.f32.xlu0 %v170
    %v172 = vpop.xlane.xlu0 %171
    %v173 = vsel %vm159, %v151, inf
    %174 = vmin.xlane.f32.xlu0 %v173
    %v175 = vpop.xlane.xlu0 %174
    %v176 = vsel %vm159, %v151, -inf
    %177 = vmax.xlane.f32.xlu0 %v176
    %v178 = vpop.xlane.xlu0 %177
    %v179 = vsel %vm166, %v151, inf
    %180 = vmin.xlane.f32.xlu0 %v179
    %v181 = vpop.xlane.xlu0 %180
    %v182 = vsel %vm166, %v151, -inf
    %183 = vmax.xlane.f32.xlu0 %v182
    %v184 = vpop.xlane.xlu0 %183
    %vm185 = vcmask 343328
    %v186 = vsel %vm185, %v135, inf
    %187 = vmin.xlane.f32.xlu0 %v186
    %v188 = vpop.xlane.xlu0 %187
    %v189 = vsel %vm185, %v135, -inf
    %190 = vmax.xlane.f32.xlu0 %v189
    %v191 = vpop.xlane.xlu0 %190
    %vm192 = vcmask 392528
    %v193 = vsel %vm192, %v135, inf
    %194 = vmin.xlane.f32.xlu0 %v193
    %v195 = vpop.xlane.xlu0 %194
    %v196 = vsel %vm192, %v135, -inf
    %197 = vmax.xlane.f32.xlu0 %v196
    %v198 = vpop.xlane.xlu0 %197
    %vm199 = vcmask 7168
    %v200 = vsel %vm199, %v162, %v165
    %vm201 = vcmask 15360
    %v202 = vsel %vm201, %v200, %v175
    %v203 = vsel %vm105, %v202, %v178
    %vm204 = vcmask 31744
    %v205 = vsel %vm204, %v203, %v188
    %vm206 = vcmask 39936
    %v207 = vsel %vm206, %v205, %v191
    %v208 = vsel %vm199, %v169, %v172
    %v209 = vsel %vm201, %v208, %v181
    %v210 = vsel %vm105, %v209, %v184
    %v211 = vsel %vm204, %v210, %v195
    %v212 = vsel %vm206, %v211, %v198
    %v213 = vsub.f32 %v89, %v92
    %v214 = vrcp.pop %v92
    %v215 = vmul.f32 %v92, %v214
    %v216 = vsub.f32 1.0, %v215
    %v217 = vmul.f32 %v214, %v216
    %v218 = vadd.f32 %v214, %v217
    %vm219 = vweird.f32 %v92
    %vm220 = vweird.f32 %v214
    %vm221 = vmor %vm219, %vm220
    %v222 = vsel %vm221, %v214, %v218
    %v223 = vand.u32 2147483647, %v92
    %vm224 = vcmp.eq.f32.partialorder %v223, 8.507059e+37
    %v225 = vand.u32 %v92, 2147483648
    %v226 = vor.u32 1.1754944e-38, %v225
    %v227 = vsel %vm224, %v226, %v222
    %v228 = vmul.f32 %v89, %v227
    %v229 = vlog2.pop %v228
    %v230 = vmul.f32 %v229, 0.6931472
    %v231 = vand.u32 2147483647, %v207
    %v232 = vand.u32 2147483647, %v212
    %v233 = vadd.f32 %v232, 1e-12
    %v234 = vrcp.pop %v233
    %v235 = vmul.f32 %v233, %v234
    %v236 = vsub.f32 1.0, %v235
    %v237 = vmul.f32 %v234, %v236
    %v238 = vadd.f32 %v234, %v237
    %vm239 = vweird.f32 %v233
    %vm240 = vweird.f32 %v234
    %vm241 = vmor %vm239, %vm240
    %v242 = vsel %vm241, %v234, %v238
    %v243 = vand.u32 2147483647, %v233
    %vm244 = vcmp.eq.f32.partialorder %v243, 8.507059e+37
    %v245 = vand.u32 %v233, 2147483648
    %v246 = vor.u32 1.1754944e-38, %v245
    %v247 = vsel %vm244, %v246, %v242
    %v248 = vmul.f32 %v231, %v247
    %v249 = vlog2.pop %v248
    %v250 = vmul.f32 %v249, 0.6931472
    %252 = vrot.lane.b32.xlu0 %v230, 125
    %v253 = vpop.permute.xlu0 %252
    %256 = vrot.lane.b32.xlu0 %v250, 6
    %v257 = vpop.permute.xlu0 %256
    %v259 = vsel %vm105, %v213, %v253
    %vm260 = vcmask 48128
    %v261 = vsel %vm260, %v259, %v257
    %v262 = vpack.c.bf16 %v261, %v261
    %v263 = vld [vmem:[#allocation5] sm:$0xf]
    %v264 = vld [vmem:[#allocation5 + $0x4] sm:$0x3]
    %v265 = vld [vmem:[%s2] sm:$0x1]
    %v267 = vperm.slane %v265, 0
    %v271 = vunpack.c.l.b16 %v263
    %v272 = vunpack.c.l.b16 %v264
    %v273 = vpack.c.b16 %v272, %v271
    %vm274 = vcmask 97280
    %v276 = vsel %vm274, %v262, 0
    %vm278 = vcmask 1045504
    %v280 = vsel %vm278, %v273, 0
    %282 = vmatpush.bf16.msra.mxu0 0
    %283 = vmatpush.bf16.msra.mxu0 0
    %284 = vmatpush.bf16.msra.mxu0 0
    %285 = vmatpush.bf16.msra.mxu0 0
    %286 = vmatpush.bf16.msra.mxu0 0
    %287 = vmatpush.bf16.msra.mxu0 0
    %288 = vmatpush.bf16.msra.mxu0 0
    %289 = vmatpush.bf16.msra.mxu0 %v280
    %290 = vmatmul.bf16.gmra.mxu0 %v276
    %v291 = vpop.f32.mrf.mxu0
    %v292 = vadd.f32 %v267, %v291
    %v293 = vpop.f32.mrf.mxu0
    %294 = vdwg.mxu0
    %v295 = vmax.f32 %v292, 0.0
    %v296 = vpack.c.bf16 %v295, %v295
    %v297 = vld [vmem:[#allocation7] sm:$0xf]
    %v298 = vld [vmem:[#allocation7 + $0x4] sm:$0xf]
    %v299 = vld [vmem:[#allocation7 + $0x8] sm:$0xf]
    %v300 = vld [vmem:[#allocation7 + $0xc] sm:$0xf]
    %v301 = vld [vmem:[#allocation7 + $0x10] sm:$0xf]
    %v302 = vld [vmem:[#allocation7 + $0x14] sm:$0xf]
    %v303 = vld [vmem:[#allocation7 + $0x18] sm:$0xf]
    %v304 = vld [vmem:[#allocation7 + $0x1c] sm:$0xf]
    %v305 = vld [vmem:[%s4] sm:$0x1]
    %v307 = vperm.slane %v305, 0
    %v317 = vunpack.c.l.b16 %v297
    %v318 = vunpack.c.l.b16 %v298
    %v319 = vunpack.c.l.b16 %v299
    %v320 = vunpack.c.l.b16 %v300
    %v321 = vunpack.c.l.b16 %v301
    %v322 = vunpack.c.l.b16 %v302
    %v323 = vunpack.c.l.b16 %v303
    %v324 = vunpack.c.l.b16 %v304
    %v325 = vpack.c.b16 %v318, %v317
    %v326 = vpack.c.b16 %v320, %v319
    %v327 = vpack.c.b16 %v322, %v321
    %v328 = vpack.c.b16 %v324, %v323
    %vm333 = vcmask 523264
    %v335 = vsel %vm333, %v296, 0
    %337 = vmatpush.bf16.msra.mxu0 0
    %338 = vmatpush.bf16.msra.mxu0 0
    %339 = vmatpush.bf16.msra.mxu0 0
    %340 = vmatpush.bf16.msra.mxu0 0
    %341 = vmatpush.bf16.msra.mxu0 %v328
    %342 = vmatpush.bf16.msra.mxu0 %v327
    %343 = vmatpush.bf16.msra.mxu0 %v326
    %344 = vmatpush.bf16.msra.mxu0 %v325
    %345 = vmatmul.bf16.gmra.mxu0 %v335
    %v346 = vpop.f32.mrf.mxu0
    %v347 = vadd.f32 %v307, %v346
    %v348 = vpop.f32.mrf.mxu0
    %349 = vdwg.mxu0
    %v350 = vmax.f32 %v347, 0.0
    %v351 = vpack.c.bf16 %v350, %v350
    %v352 = vld [vmem:[#allocation8] sm:$0xf]
    %v353 = vld [vmem:[#allocation8 + $0x4] sm:$0xf]
    %v354 = vld [vmem:[#allocation8 + $0x8] sm:$0xf]
    %v355 = vld [vmem:[#allocation8 + $0xc] sm:$0xf]
    %v356 = vld [vmem:[#allocation8 + $0x10] sm:$0xf]
    %v357 = vld [vmem:[#allocation8 + $0x14] sm:$0xf]
    %v358 = vld [vmem:[#allocation8 + $0x18] sm:$0xf]
    %v359 = vld [vmem:[#allocation8 + $0x1c] sm:$0xf]
    %v360 = vld [vmem:[#allocation8 + $0x20] sm:$0xf]
    %v361 = vld [vmem:[#allocation8 + $0x24] sm:$0xf]
    %v362 = vld [vmem:[#allocation8 + $0x28] sm:$0xf]
    %v363 = vld [vmem:[#allocation8 + $0x2c] sm:$0xf]
    %v364 = vld [vmem:[#allocation8 + $0x30] sm:$0xf]
    %v365 = vld [vmem:[#allocation8 + $0x34] sm:$0xf]
    %v366 = vld [vmem:[#allocation8 + $0x38] sm:$0xf]
    %v367 = vld [vmem:[#allocation8 + $0x3c] sm:$0xf]
    %v368 = vld [vmem:[%s6] sm:$0x1]
    %v370 = vperm.slane %v368, 0
    %v388 = vunpack.c.l.b16 %v352
    %v389 = vunpack.c.l.b16 %v353
    %v390 = vunpack.c.l.b16 %v354
    %v391 = vunpack.c.l.b16 %v355
    %v392 = vunpack.c.l.b16 %v356
    %v393 = vunpack.c.l.b16 %v357
    %v394 = vunpack.c.l.b16 %v358
    %v395 = vunpack.c.l.b16 %v359
    %v396 = vunpack.c.l.b16 %v360
    %v397 = vunpack.c.l.b16 %v361
    %v398 = vunpack.c.l.b16 %v362
    %v399 = vunpack.c.l.b16 %v363
    %v400 = vunpack.c.l.b16 %v364
    %v401 = vunpack.c.l.b16 %v365
    %v402 = vunpack.c.l.b16 %v366
    %v403 = vunpack.c.l.b16 %v367
    %v404 = vpack.c.b16 %v389, %v388
    %v405 = vpack.c.b16 %v391, %v390
    %v406 = vpack.c.b16 %v393, %v392
    %v407 = vpack.c.b16 %v395, %v394
    %v408 = vpack.c.b16 %v397, %v396
    %v409 = vpack.c.b16 %v399, %v398
    %v410 = vpack.c.b16 %v401, %v400
    %v411 = vpack.c.b16 %v403, %v402
    %420 = vmatpush.bf16.msra.mxu0 %v411
    %421 = vmatpush.bf16.msra.mxu0 %v410
    %422 = vmatpush.bf16.msra.mxu0 %v409
    %423 = vmatpush.bf16.msra.mxu0 %v408
    %424 = vmatpush.bf16.msra.mxu0 %v407
    %425 = vmatpush.bf16.msra.mxu0 %v406
    %426 = vmatpush.bf16.msra.mxu0 %v405
    %427 = vmatpush.bf16.msra.mxu0 %v404
    %428 = vmatmul.bf16.gmra.mxu0 %v351
    %v429 = vpop.f32.mrf.mxu0
    %v430 = vadd.f32 %v370, %v429
    %v431 = vpop.f32.mrf.mxu0
    %432 = vdwg.mxu0
    %433 = vst [vmem:[#allocation10] sm:$0xff] %v430
    // Predicated region
    $region46: #{tpu_custom_call.1} parent=1 // pred_check
      _
    $region47: #{tpu_custom_call.1} parent=1 // pred_check_branch
      %435 = sbr.rel (0) target = $region49
    $region48: #{tpu_custom_call.1} parent=1 // pred_region
      %437 = vsyncadd [#allocation4], 0
      %s439 = sshll.u32 [#allocation10], 4
      %s440 = int_to_ptr.vmem [resolvable:$true] %s439
      %s441 = sshll.u32 %s7, 4
      %s442 = int_to_ptr.hbm [resolvable:$true] %s441
      %444 = dma.vmem_to_hbm [thread:$0]  %s440, 128, %s442, [#allocation4]
    $region49: #{tpu_custom_call.1} parent=1 // pred_fallthru
      _
    // Predicated region
    $region50: #{tpu_custom_call.1} parent=1 // pred_check
      _
    $region51: #{tpu_custom_call.1} parent=1 // pred_check_branch
      %446 = sbr.rel (0) target = $region53
    $region52: #{tpu_custom_call.1} parent=1 // pred_region
      %448 = dma.done [#allocation4], 128
    $region53: #{tpu_custom_call.1} parent=1 // pred_fallthru
      _
    %449 = vsyncpa [#allocation3], 1
    %450 = vsyncpa [#allocation6], 1
    %451 = vsyncpa [#allocation9], 1
    %452 = vsyncpa [#allocation4], 1

</llo_original>
